<compile_context>
chip_gen: v7x
topology: tpu7x:2x2x1
jax: 0.10.0
libtpu: 0.0.40
codegen_flags: <defaults>
</compile_context>

<pallas_src>
import jax
import jax.numpy as jnp
from jax.experimental import pallas as pl
from jax.experimental.pallas import tpu as pltpu

FEAT = 5          # each modality's feature dim (Linear in_features = 2*FEAT = 10)
N_MODALITIES = 2  # Linear out_features
LANE = 128        # TPU lane width


def _round_up(x, m):
    return ((x + m - 1) // m) * m


def _attention_fusion_kernel(db_ref, dw_m_ref, dw_n_ref, m_ref, n_ref, out_ref):
    # db_ref:   (1,)      f32 SMEM scalar, b[0] - b[1]
    # dw_m_ref: (FEAT, 1) f32 VMEM column, w[0,:FEAT]  - w[1,:FEAT]
    # dw_n_ref: (FEAT, 1) f32 VMEM column, w[0,FEAT:]  - w[1,FEAT:]
    # m_ref / n_ref: (FEAT, T) batch-on-lanes market / news tiles
    # out_ref:       (FEAT, T) fused output tile
    m = m_ref[...].astype(jnp.float32)                       # (FEAT, T)
    n = n_ref[...].astype(jnp.float32)                       # (FEAT, T)

    # Score difference s0 - s1: per-row coefficient multiply (VPU) + sublane
    # reduce (XLU) — a handful of vector ops per tile instead of a 10-step
    # (1, T) FMA chain.
    contrib = dw_m_ref[...] * m + dw_n_ref[...] * n          # (FEAT, T)
    diff = jnp.sum(contrib, axis=0, keepdims=True) + db_ref[0]   # (1, T)

    # 2-way softmax == sigmoid of the score difference (EUP, numerically stable).
    p_market = jax.nn.sigmoid(diff)                           # (1, T)

    # fused = p*m + (1-p)*n  ==  n + p*(m - n)
    out_ref[...] = (n + p_market * (m - n)).astype(out_ref.dtype)


def attention_fusion(market_feat, news_feat, weight, bias, *, lane_tile=65536):
    """market_feat, news_feat: (B, FEAT). weight: (2, 2*FEAT) torch layout. bias: (2,)."""
    assert market_feat.shape == news_feat.shape
    B, D = market_feat.shape
    assert D == FEAT
    out_dtype = market_feat.dtype
    itemsize = jnp.dtype(out_dtype).itemsize

    # Batch-on-lanes layout; two separate sublane-aligned slabs (no concat pass).
    market_t = market_feat.T                                  # (FEAT, B)
    news_t = news_feat.T                                      # (FEAT, B)

    # Tile sizing: multiple of 128 lanes, large enough to amortize per-step
    # overhead, but capped so large B still yields >= 2 blocks (v7x: 2 TCs).
    tile = min(int(lane_tile), _round_up(pl.cdiv(B, 2), LANE))
    tile = max(LANE, (tile // LANE) * LANE)
    n_blocks = pl.cdiv(B, tile)
    b_pad = n_blocks * tile
    if b_pad != B:
        # Zero-padded columns produce zero outputs and are sliced off below.
        market_t = jnp.pad(market_t, ((0, 0), (0, b_pad - B)))
        news_t = jnp.pad(news_t, ((0, 0), (0, b_pad - B)))

    # Host-side precompute of the score-difference coefficients.
    w = weight.astype(jnp.float32)                            # (2, 2*FEAT)
    b = bias.astype(jnp.float32)                              # (2,)
    dw = w[0] - w[1]                                          # (2*FEAT,)
    dw_m = dw[:FEAT].reshape(FEAT, 1)                         # (FEAT, 1)
    dw_n = dw[FEAT:].reshape(FEAT, 1)                         # (FEAT, 1)
    db = (b[0] - b[1]).reshape(1)                             # (1,)

    cost = pl.CostEstimate(
        flops=35 * b_pad,
        transcendentals=b_pad,
        bytes_accessed=3 * FEAT * b_pad * itemsize,
    )

    out_t = pl.pallas_call(
        _attention_fusion_kernel,
        out_shape=jax.ShapeDtypeStruct((FEAT, b_pad), out_dtype),
        grid_spec=pltpu.PrefetchScalarGridSpec(
            num_scalar_prefetch=0,
            grid=(n_blocks,),
            in_specs=[
                pl.BlockSpec(memory_space=pltpu.MemorySpace.SMEM),   # db scalar
                pl.BlockSpec((FEAT, 1), lambda i: (0, 0)),           # dw_market column
                pl.BlockSpec((FEAT, 1), lambda i: (0, 0)),           # dw_news column
                pl.BlockSpec((FEAT, tile), lambda i: (0, i)),        # market (FEAT, T)
                pl.BlockSpec((FEAT, tile), lambda i: (0, i)),        # news   (FEAT, T)
            ],
            out_specs=pl.BlockSpec((FEAT, tile), lambda i: (0, i)),
        ),
        compiler_params=pltpu.CompilerParams(
            dimension_semantics=("parallel",),
            # Large lane tiles + double buffering: keep headroom above v5e's
            # 16 MiB default scoped VMEM, stay well under v7x's 64 MiB physical.
            vmem_limit_bytes=48 * 1024 * 1024,
        ),
        cost_estimate=cost,
    )(db, dw_m, dw_n, market_t, news_t)

    # Back to the (B, FEAT) layout of the PyTorch module.
    return out_t[:, :B].T.astype(out_dtype)


def attention_fusion_ref(market_feat, news_feat, weight, bias):
    concat = jnp.concatenate([market_feat, news_feat], axis=-1)
    scores = concat @ weight.T + bias
    attn = jax.nn.softmax(scores, axis=-1)
    return attn[..., 0:1] * market_feat + attn[..., 1:2] * news_feat


if __name__ == "__main__":
    key = jax.random.PRNGKey(0)
    k_m, k_n, k_w, k_b = jax.random.split(key, 4)

    # Deterministic Linear(10, 2) params (PyTorch-style uniform(-1/sqrt(10), 1/sqrt(10)))
    bound = 1.0 / jnp.sqrt(10.0)
    weight = jax.random.uniform(k_w, (N_MODALITIES, 2 * FEAT), minval=-bound, maxval=bound)
    bias = jax.random.uniform(k_b, (N_MODALITIES,), minval=-bound, maxval=bound)

    # Small primary check (B = 8).
    B = 8
    market = jax.random.normal(k_m, (B, FEAT), dtype=jnp.float32)
    news = jax.random.normal(k_n, (B, FEAT), dtype=jnp.float32)

    out = attention_fusion(market, news, weight, bias)
    out = jax.block_until_ready(out)
    ref = attention_fusion_ref(market, news, weight, bias)
    assert out.shape == (B, FEAT)
    assert jnp.allclose(out, ref, atol=1e-5, rtol=1e-5), "mismatch vs reference (B=8)"

    # Secondary check exercising padding + multi-block grid (B not a multiple of 128).
    B2 = 300
    k_m2, k_n2 = jax.random.split(k_m)
    market2 = jax.random.normal(k_m2, (B2, FEAT), dtype=jnp.float32)
    news2 = jax.random.normal(k_n2, (B2, FEAT), dtype=jnp.float32)
    out2 = jax.block_until_ready(
        attention_fusion(market2, news2, weight, bias, lane_tile=128)
    )
    ref2 = attention_fusion_ref(market2, news2, weight, bias)
    assert out2.shape == (B2, FEAT)
    assert jnp.allclose(out2, ref2, atol=1e-5, rtol=1e-5), "mismatch vs reference (B=300)"

    print("KERNEL_OK")
</pallas_src>

<mosaic_0001>
module attributes {stable_mosaic.version = 11 : i64} {
  func.func @_attention_fusion_kernel(%arg0: i32, %arg1: memref<1xf32, #tpu.memory_space<smem>>, %arg2: memref<5x1xf32, #tpu.memory_space<vmem>>, %arg3: memref<5x1xf32, #tpu.memory_space<vmem>>, %arg4: memref<5x128xf32, #tpu.memory_space<vmem>>, %arg5: memref<5x128xf32, #tpu.memory_space<vmem>>, %arg6: memref<5x128xf32, #tpu.memory_space<vmem>>) attributes {dimension_semantics = [#tpu.dimension_semantics<parallel>], iteration_bounds = array<i64: 1>, scalar_prefetch = 0 : i64, scratch_operands = 0 : i64, tpu.core_type = #tpu.core_type<tc>, window_params = [{transform_indices = @transform_0, window_bounds = array<i64: 1>}, {pipeline_mode = #tpu.pipeline_mode<synchronous>, transform_indices = @transform_1, window_bounds = array<i64: 5, 1>}, {pipeline_mode = #tpu.pipeline_mode<synchronous>, transform_indices = @transform_2, window_bounds = array<i64: 5, 1>}, {transform_indices = @transform_3, window_bounds = array<i64: 5, 128>}, {transform_indices = @transform_4, window_bounds = array<i64: 5, 128>}, {transform_indices = @transform_5, window_bounds = array<i64: 5, 128>}]} {
    %c0 = arith.constant 0 : index
    %c0_0 = arith.constant 0 : index
    %0 = vector.load %arg4[%c0, %c0_0] : memref<5x128xf32, #tpu.memory_space<vmem>>, vector<5x128xf32>
    %c0_1 = arith.constant 0 : index
    %c0_2 = arith.constant 0 : index
    %1 = vector.load %arg5[%c0_1, %c0_2] : memref<5x128xf32, #tpu.memory_space<vmem>>, vector<5x128xf32>
    %c0_3 = arith.constant 0 : index
    %c0_4 = arith.constant 0 : index
    %2 = vector.load %arg2[%c0_3, %c0_4] : memref<5x1xf32, #tpu.memory_space<vmem>>, vector<5x1xf32>
    %3 = vector.broadcast %2 : vector<5x1xf32> to vector<5x128xf32>
    %4 = arith.mulf %3, %0 : vector<5x128xf32>
    %c0_5 = arith.constant 0 : index
    %c0_6 = arith.constant 0 : index
    %5 = vector.load %arg3[%c0_5, %c0_6] : memref<5x1xf32, #tpu.memory_space<vmem>>, vector<5x1xf32>
    %6 = vector.broadcast %5 : vector<5x1xf32> to vector<5x128xf32>
    %7 = arith.mulf %6, %1 : vector<5x128xf32>
    %8 = arith.addf %4, %7 : vector<5x128xf32>
    %cst = arith.constant dense<0.000000e+00> : vector<128xf32>
    %9 = vector.multi_reduction <add>, %8, %cst [0] : vector<5x128xf32> to vector<128xf32>
    %10 = vector.shape_cast %9 : vector<128xf32> to vector<1x128xf32>
    %c0_7 = arith.constant 0 : index
    %11 = memref.load %arg1[%c0_7] : memref<1xf32, #tpu.memory_space<smem>>
    %12 = vector.broadcast %11 : f32 to vector<1x128xf32>
    %13 = arith.addf %10, %12 : vector<1x128xf32>
    %14 = arith.negf %13 : vector<1x128xf32>
    %15 = math.exp %14 : vector<1x128xf32>
    %cst_8 = arith.constant 1.000000e+00 : f32
    %16 = vector.broadcast %cst_8 : f32 to vector<1x128xf32>
    %17 = arith.addf %16, %15 : vector<1x128xf32>
    %18 = arith.divf %16, %17 : vector<1x128xf32>
    %19 = arith.subf %0, %1 : vector<5x128xf32>
    %20 = vector.broadcast %18 : vector<1x128xf32> to vector<5x128xf32>
    %21 = arith.mulf %20, %19 : vector<5x128xf32>
    %22 = arith.addf %1, %21 : vector<5x128xf32>
    %c0_9 = arith.constant 0 : index
    %c0_10 = arith.constant 0 : index
    %23 = vector.load %arg6[%c0_9, %c0_10] : memref<5x128xf32, #tpu.memory_space<vmem>>, vector<5x128xf32>
    tpu.vector_store %arg6[%c0_9, %c0_10], %22 {strides = array<i32>} : memref<5x128xf32, #tpu.memory_space<vmem>>, vector<5x128xf32>,
    return
  }
  func.func @transform_0(%arg0: i32) -> i32 {
    %c0_i32 = arith.constant 0 : i32
    %c0_i32_0 = arith.constant 0 : i32
    return %c0_i32 : i32
  }
  func.func @transform_1(%arg0: i32) -> (i32, i32) {
    %c0_i32 = arith.constant 0 : i32
    %c0_i32_0 = arith.constant 0 : i32
    %c0_i32_1 = arith.constant 0 : i32
    return %c0_i32, %c0_i32_0 : i32, i32
  }
  func.func @transform_2(%arg0: i32) -> (i32, i32) {
    %c0_i32 = arith.constant 0 : i32
    %c0_i32_0 = arith.constant 0 : i32
    %c0_i32_1 = arith.constant 0 : i32
    return %c0_i32, %c0_i32_0 : i32, i32
  }
  func.func @transform_3(%arg0: i32) -> (i32, i32) {
    %c0_i32 = arith.constant 0 : i32
    %c0_i32_0 = arith.constant 0 : i32
    return %c0_i32, %arg0 : i32, i32
  }
  func.func @transform_4(%arg0: i32) -> (i32, i32) {
    %c0_i32 = arith.constant 0 : i32
    %c0_i32_0 = arith.constant 0 : i32
    return %c0_i32, %arg0 : i32, i32
  }
  func.func @transform_5(%arg0: i32) -> (i32, i32) {
    %c0_i32 = arith.constant 0 : i32
    %c0_i32_0 = arith.constant 0 : i32
    return %c0_i32, %arg0 : i32, i32
  }
}

</mosaic_0001>

<llo_original>
// kernel: tpu_custom_call.1
$region0: #{tpu_custom_call.1}
  #allocation0 [shape = 'u32[]', space=smem, size = 0x4, offset = 0x4, fixed_abs, tag = 'smem constant byte address 0x4 - core index']
  #allocation1 [shape = 'u32[144,128]{1,0:T(1,128)}', space=vmem, size = 0x12000, scoped, tag = 'internal scratch']
  #allocation2 [shape = 'f32[1]{0:T(128)S(6)}', space=smem, size = 0x200, scoped, tag = 'scoped memory for tpu_custom_call.1']
  %s0 = inlined_call_operand.<no memory space> [shape: f32[1], index: 0, kind: input, shape index: {}]
  %s1 = inlined_call_operand.vmem [shape: f32[5,1], index: 1, kind: input, shape index: {}]
  %s2 = inlined_call_operand.vmem [shape: f32[5,1], index: 2, kind: input, shape index: {}]
  %s3 = inlined_call_operand.vmem [shape: f32[5,128], index: 3, kind: input, shape index: {}]
  %s4 = inlined_call_operand.vmem [shape: f32[5,128], index: 4, kind: input, shape index: {}]
  %s5 = inlined_call_operand.hbm [shape: f32[5,128], index: 5, kind: output, shape index: {}]
  %s6 = sld [smem:[#allocation0]]
  $region30: #{tpu_custom_call.1} parent=0
    _
  %s8 = ssub.s32 1, %s6
  %s9 = scalar_select 0, %s8, %s6
  %10 = sst [smem:[#allocation2]] %s0
  $region1: #{tpu_custom_call.1} parent=0
    #allocation3 [shape = 'u8[4096]{0}', space=vmem, size = 0x1000, scoped, tag = 'output window, operand 0, single buffered']
    #allocation4 [shape = 's32[1]{0}', space=sflag, size = 0x4, scoped, tag = 'scoped memory for tpu_custom_call.1']
    %11 = vsyncpa [#allocation4], 0
    // Predicated region
    $region2: #{tpu_custom_call.1} parent=1 // pred_check
      _
    $region3: #{tpu_custom_call.1} parent=1 // pred_check_branch
      %13 = sbr.rel (0) target = $region5
    $region4: #{tpu_custom_call.1} parent=1 // pred_region
      _
    $region5: #{tpu_custom_call.1} parent=1 // pred_fallthru
      _
    // Predicated region
    $region6: #{tpu_custom_call.1} parent=1 // pred_check
      _
    $region7: #{tpu_custom_call.1} parent=1 // pred_check_branch
      %15 = sbr.rel (0) target = $region9
    $region8: #{tpu_custom_call.1} parent=1 // pred_region
      _
    $region9: #{tpu_custom_call.1} parent=1 // pred_fallthru
      _
    // Predicated region
    $region10: #{tpu_custom_call.1} parent=1 // pred_check
      _
    $region11: #{tpu_custom_call.1} parent=1 // pred_check_branch
      %17 = sbr.rel (0) target = $region13
    $region12: #{tpu_custom_call.1} parent=1 // pred_region
      _
    $region13: #{tpu_custom_call.1} parent=1 // pred_fallthru
      _
    // Predicated region
    $region14: #{tpu_custom_call.1} parent=1 // pred_check
      _
    $region15: #{tpu_custom_call.1} parent=1 // pred_check_branch
      %19 = sbr.rel (0) target = $region17
    $region16: #{tpu_custom_call.1} parent=1 // pred_region
      _
    $region17: #{tpu_custom_call.1} parent=1 // pred_fallthru
      _
    // Predicated region
    $region18: #{tpu_custom_call.1} parent=1 // pred_check
      _
    $region19: #{tpu_custom_call.1} parent=1 // pred_check_branch
      %21 = sbr.rel (0) target = $region21
    $region20: #{tpu_custom_call.1} parent=1 // pred_region
      _
    $region21: #{tpu_custom_call.1} parent=1 // pred_fallthru
      _
    %v22 = vld [vmem:[%s3] sm:$0x1f]
    %v23 = vld [vmem:[%s4] sm:$0x1f]
    %v24 = vld [vmem:[%s1] sm:$0x1f]
    %26 = vset.pattern.permute.xlu0 0
    %27 = vperm.xlu0 %26, %v24
    %v28 = vpop.permute.xlu0 %27
    %v30 = vmul.f32 %v28, %v22
    %v31 = vld [vmem:[%s2] sm:$0x1f]
    %33 = vset.pattern.permute.xlu0 0
    %34 = vperm.xlu0 %33, %v31
    %v35 = vpop.permute.xlu0 %34
    %v37 = vmul.f32 %v35, %v23
    %v38 = vadd.f32 %v30, %v37
    %vm39 = vcmask 1044480
    %v40 = vsel %vm39, %v38, 0.0
    %v41 = vrot.slane %v40, 4
    %v42 = vadd.f32 %v40, %v41
    %v43 = vrot.slane %v42, 2
    %v44 = vadd.f32 %v42, %v43
    %v45 = vrot.slane %v44, 1
    %v46 = vadd.f32 %v44, %v45
    %s47 = sld [smem:[#allocation2]]
    %v48 = vstv %s47
    %v49 = vadd.f32 %v46, %v48
    %v50 = vxor.u32 %v49, 2147483648
    %v51 = vmul.f32 %v50, 1.442695
    %v52 = vpow.pop %v51
    %v53 = vadd.f32 %v52, 1.0
    %v54 = vrcp.pop %v53
    %v55 = vmul.f32 1.0, %v54
    %v56 = vsub.f32 %v22, %v23
    %v57 = vmul.f32 %v55, %v56
    %v58 = vadd.f32 %v23, %v57
    %59 = vst [vmem:[#allocation3] sm:$0x1f] %v58
    // Predicated region
    $region22: #{tpu_custom_call.1} parent=1 // pred_check
      _
    $region23: #{tpu_custom_call.1} parent=1 // pred_check_branch
      %61 = sbr.rel (0) target = $region25
    $region24: #{tpu_custom_call.1} parent=1 // pred_region
      %s63 = ssub.s32 128, 128
      %64 = vsyncadd [#allocation4], %s63
      %s66 = sshll.u32 [#allocation3], 4
      %s67 = int_to_ptr.vmem [resolvable:$true] %s66
      %69 = dma.vmem_to_hbm [thread:$0]  %s67, 128, %s5, [#allocation4]
    $region25: #{tpu_custom_call.1} parent=1 // pred_fallthru
      _
    // Predicated region
    $region26: #{tpu_custom_call.1} parent=1 // pred_check
      _
    $region27: #{tpu_custom_call.1} parent=1 // pred_check_branch
      %71 = sbr.rel (0) target = $region29
    $region28: #{tpu_custom_call.1} parent=1 // pred_region
      %72 = dma.done [#allocation4], 128
    $region29: #{tpu_custom_call.1} parent=1 // pred_fallthru
      _
    %73 = vsyncpa [#allocation4], 1

</llo_original>
